<compile_context>
chip_gen: v6e
topology: v6e:2x2x1
jax: 0.10.0
libtpu: 0.0.40
codegen_flags: <defaults>
</compile_context>

<pallas_src>
import functools

import jax
import jax.numpy as jnp
import numpy as np
from jax.experimental import pallas as pl
from jax.experimental.pallas import tpu as pltpu

NEURONS = 20            # hidden width of the PyTorch module
NUM_LAYERS = 5          # number of hidden Linear layers
DP = 128                # lane width of one physical row
PACK = DP // NEURONS    # 6 samples packed per 128-lane row (lanes 120..127 dead)
KIN = 16                # packed input width: 6 samples x 2 features = 12 -> pad to 16
OUT_W = 8               # packed output width: 6 samples -> pad to 8
TB_MAX = 512            # max physical rows per tile (= 3072 samples); sweep 512-2048


def _round_up(a, m):
    return ((a + m - 1) // m) * m


def default_compute_dtype():
    """bf16 weights/activations on v6e/v7x, f32 on older (v5e and earlier)."""
    kind = jax.devices()[0].device_kind.lower()
    if any(t in kind for t in ("v2", "v3", "v4", "v5")):
        return jnp.float32
    return jnp.bfloat16


def wave_mlp_kernel(xp_ref, win_ref, bin_ref, wh_ref, bh_ref, wout_ref,
                    bout_ref, o_ref, *, compute_dtype):
    """One batch tile of the fused, sample-packed 7-layer MLP.

    xp_ref  : (TB, 16)      packed inputs, xp[r, 2*s + c] = x[6*r + s, c]
    win_ref : (16, 128)     block-diagonal packed W_in
    bin_ref : (1, 128)      b_in replicated per 20-lane segment (f32)
    wh_ref  : (L, 128, 128) block-diagonal packed hidden weights (VMEM-resident)
    bh_ref  : (L, 1, 128)   packed hidden biases (f32)
    wout_ref: (128, 128)    packed output weights; column s <- segment s
    bout_ref: (1, 1)        b_out scalar (SMEM)
    o_ref   : (TB, 8)       packed outputs, o[r, s] = y[6*r + s]
    """
    # x = self.linear_in(x): one small-K MXU matmul covering all 6 slots.
    h = jnp.dot(xp_ref[...], win_ref[...],
                preferred_element_type=jnp.float32) + bin_ref[...]

    # for layer in self.layers: x = tanh(layer(x))
    # Block-diagonal weights keep the 6 packed samples independent.
    for l in range(NUM_LAYERS):
        h = jnp.tanh(
            jnp.dot(h.astype(compute_dtype), wh_ref[l],
                    preferred_element_type=jnp.float32) + bh_ref[l])

    # x = self.linear_out(x): scatter-matmul puts sample s's output in lane s.
    out = jnp.dot(h.astype(compute_dtype), wout_ref[...],
                  preferred_element_type=jnp.float32) + bout_ref[0, 0]
    o_ref[...] = out[:, :OUT_W].astype(o_ref.dtype)


def prepare_params(params, compute_dtype=None):
    """One-time block-diagonal packing of parameters to MXU-friendly shapes.

    Call once; pass the result to wave_forward repeatedly.  Weights are cast
    to `compute_dtype` (auto: bf16 on v6e/v7x, f32 on v5e); biases stay f32.
    """
    if compute_dtype is None:
        compute_dtype = default_compute_dtype()
    w_in, b_in, w_h, b_h, w_out, b_out = params

    win_p = jnp.zeros((KIN, DP), jnp.float32)
    bin_p = jnp.zeros((1, DP), jnp.float32)
    wh_p = jnp.zeros((NUM_LAYERS, DP, DP), jnp.float32)
    bh_p = jnp.zeros((NUM_LAYERS, 1, DP), jnp.float32)
    wout_p = jnp.zeros((DP, DP), jnp.float32)
    for s in range(PACK):
        r0, c0 = 2 * s, NEURONS * s
        win_p = win_p.at[r0:r0 + 2, c0:c0 + NEURONS].set(w_in)
        bin_p = bin_p.at[0, c0:c0 + NEURONS].set(b_in)
        wh_p = wh_p.at[:, c0:c0 + NEURONS, c0:c0 + NEURONS].set(w_h)
        bh_p = bh_p.at[:, 0, c0:c0 + NEURONS].set(b_h)
        wout_p = wout_p.at[c0:c0 + NEURONS, s].set(w_out[:, 0])
    bout_p = jnp.asarray(b_out, jnp.float32).reshape(1, 1)

    return (win_p.astype(compute_dtype), bin_p,
            wh_p.astype(compute_dtype), bh_p,
            wout_p.astype(compute_dtype), bout_p)


@jax.jit
def wave_forward(x, padded_params):
    """x: (N, 2) float32 -> (N, 1) float32 (params from prepare_params)."""
    win_p, bin_p, wh_p, bh_p, wout_p, bout_p = padded_params
    cdt = win_p.dtype
    n = x.shape[0]

    nr = -(-n // PACK)                                  # physical rows needed
    # Cap the tile so the grid has >= 2 "parallel" steps when possible: on
    # v7x the parallel axis is what shards work across the 2 TensorCores.
    tb = min(TB_MAX, max(8, _round_up(-(-nr // 2), 8)))
    nr_pad = _round_up(nr, tb)
    grid = (nr_pad // tb,)

    # Pack 6 samples per physical row: xp[r, 2*s + c] = x[6*r + s, c].
    xpad = jnp.pad(x.astype(jnp.float32), ((0, nr_pad * PACK - n), (0, 0)))
    xp = xpad.reshape(nr_pad, PACK * 2)
    xp = jnp.pad(xp, ((0, 0), (0, KIN - PACK * 2))).astype(cdt)

    item = jnp.dtype(cdt).itemsize
    param_bytes = (item * (KIN * DP + NUM_LAYERS * DP * DP + DP * DP)
                   + 4 * ((NUM_LAYERS + 1) * DP + 1))
    cost = pl.CostEstimate(
        flops=2 * nr_pad * DP * (KIN + (NUM_LAYERS + 1) * DP),
        transcendentals=NUM_LAYERS * nr_pad * DP,
        bytes_accessed=nr_pad * (KIN * item + OUT_W * 4) + param_bytes)

    out = pl.pallas_call(
        functools.partial(wave_mlp_kernel, compute_dtype=cdt),
        out_shape=jax.ShapeDtypeStruct((nr_pad, OUT_W), jnp.float32),
        grid_spec=pltpu.PrefetchScalarGridSpec(
            num_scalar_prefetch=0,
            grid=grid,
            in_specs=[
                pl.BlockSpec((tb, KIN), lambda i: (i, 0)),                # xp
                pl.BlockSpec((KIN, DP), lambda i: (0, 0)),                # W_in
                pl.BlockSpec((1, DP), lambda i: (0, 0)),                  # b_in
                pl.BlockSpec((NUM_LAYERS, DP, DP), lambda i: (0, 0, 0)),  # W_h
                pl.BlockSpec((NUM_LAYERS, 1, DP), lambda i: (0, 0, 0)),   # b_h
                pl.BlockSpec((DP, DP), lambda i: (0, 0)),                 # W_out
                pl.BlockSpec(memory_space=pltpu.MemorySpace.SMEM),        # b_out
            ],
            out_specs=pl.BlockSpec((tb, OUT_W), lambda i: (i, 0)),
        ),
        compiler_params=pltpu.CompilerParams(
            dimension_semantics=("parallel",)),
        cost_estimate=cost,
    )(xp, win_p, bin_p, wh_p, bh_p, wout_p, bout_p)

    # Unpack: out[r, s] is the prediction for sample 6*r + s.
    return out[:, :PACK].reshape(nr_pad * PACK, 1)[:n]


def init_params(key):
    """Deterministic init mimicking torch.nn.Linear defaults U(-1/sqrt(fan_in), +)."""
    ks = jax.random.split(key, 2 * (NUM_LAYERS + 2))

    def linear(kw, kb, fan_in, fan_out):
        bound = 1.0 / np.sqrt(fan_in)
        w = jax.random.uniform(kw, (fan_in, fan_out), jnp.float32, -bound, bound)
        b = jax.random.uniform(kb, (fan_out,), jnp.float32, -bound, bound)
        return w, b

    w_in, b_in = linear(ks[0], ks[1], 2, NEURONS)
    wh, bh = [], []
    for l in range(NUM_LAYERS):
        w, b = linear(ks[2 + 2 * l], ks[3 + 2 * l], NEURONS, NEURONS)
        wh.append(w)
        bh.append(b)
    w_h = jnp.stack(wh)          # (L, 20, 20)
    b_h = jnp.stack(bh)          # (L, 20)
    w_out, b_out = linear(ks[-2], ks[-1], NEURONS, 1)
    return (w_in, b_in, w_h, b_h, w_out, b_out)


def reference_forward(x, params):
    """Pure-JAX reference with identical semantics (for validation)."""
    w_in, b_in, w_h, b_h, w_out, b_out = params
    h = x @ w_in + b_in
    for l in range(NUM_LAYERS):
        h = jnp.tanh(h @ w_h[l] + b_h[l])
    return h @ w_out + b_out


if __name__ == "__main__":
    key = jax.random.PRNGKey(0)
    k_param, k_x = jax.random.split(key)

    params = init_params(k_param)
    # Batch of (t, x) collocation points; N deliberately NOT a multiple of the
    # pack factor or the tile to exercise the pad / pack / slice path.
    x = jax.random.normal(k_x, (100, 2), jnp.float32)

    ref = reference_forward(x, params)

    # Exact-parity f32 path (valid on every generation).
    out_f32 = jax.block_until_ready(
        wave_forward(x, prepare_params(params, jnp.float32)))
    np.testing.assert_allclose(np.asarray(out_f32), np.asarray(ref),
                               rtol=1e-4, atol=1e-4)

    # Generation-tuned path (bf16 weights/activations on v6e/v7x, f32 on v5e).
    out_fast = jax.block_until_ready(wave_forward(x, prepare_params(params)))
    assert out_fast.shape == ref.shape
    assert bool(jnp.all(jnp.isfinite(out_fast)))

    print("KERNEL_OK")
</pallas_src>

<mosaic_0001>
module attributes {stable_mosaic.version = 11 : i64} {
  func.func @wave_mlp_kernel(%arg0: i32, %arg1: memref<16x16xf32, #tpu.memory_space<vmem>>, %arg2: memref<16x128xf32, #tpu.memory_space<vmem>>, %arg3: memref<1x128xf32, #tpu.memory_space<vmem>>, %arg4: memref<5x128x128xf32, #tpu.memory_space<vmem>>, %arg5: memref<5x1x128xf32, #tpu.memory_space<vmem>>, %arg6: memref<128x128xf32, #tpu.memory_space<vmem>>, %arg7: memref<1x1xf32, #tpu.memory_space<smem>>, %arg8: memref<16x8xf32, #tpu.memory_space<vmem>>) attributes {dimension_semantics = [#tpu.dimension_semantics<parallel>], iteration_bounds = array<i64: 2>, scalar_prefetch = 0 : i64, scratch_operands = 0 : i64, tpu.core_type = #tpu.core_type<tc>, window_params = [{transform_indices = @transform_0, window_bounds = array<i64: 16, 16>}, {pipeline_mode = #tpu.pipeline_mode<synchronous>, transform_indices = @transform_1, window_bounds = array<i64: 16, 128>}, {pipeline_mode = #tpu.pipeline_mode<synchronous>, transform_indices = @transform_2, window_bounds = array<i64: 1, 128>}, {pipeline_mode = #tpu.pipeline_mode<synchronous>, transform_indices = @transform_3, window_bounds = array<i64: 5, 128, 128>}, {pipeline_mode = #tpu.pipeline_mode<synchronous>, transform_indices = @transform_4, window_bounds = array<i64: 5, 1, 128>}, {pipeline_mode = #tpu.pipeline_mode<synchronous>, transform_indices = @transform_5, window_bounds = array<i64: 128, 128>}, {transform_indices = @transform_6, window_bounds = array<i64: 1, 1>}, {transform_indices = @transform_7, window_bounds = array<i64: 16, 8>}]} {
    %c0 = arith.constant 0 : index
    %c0_0 = arith.constant 0 : index
    %0 = vector.load %arg1[%c0, %c0_0] : memref<16x16xf32, #tpu.memory_space<vmem>>, vector<16x16xf32>
    %c0_1 = arith.constant 0 : index
    %c0_2 = arith.constant 0 : index
    %1 = vector.load %arg2[%c0_1, %c0_2] : memref<16x128xf32, #tpu.memory_space<vmem>>, vector<16x128xf32>
    %cst = arith.constant dense<0.000000e+00> : vector<16x128xf32>
    %2 = tpu.matmul %0, %1, %cst {dimension_numbers = #tpu.dot_dimension_numbers<[1], [0], [0], [1], [0, 0, 1, 1], [], []>} : vector<16x16xf32>, vector<16x128xf32>, vector<16x128xf32> -> vector<16x128xf32>
    %c0_3 = arith.constant 0 : index
    %c0_4 = arith.constant 0 : index
    %3 = vector.load %arg3[%c0_3, %c0_4] : memref<1x128xf32, #tpu.memory_space<vmem>>, vector<1x128xf32>
    %4 = vector.broadcast %3 : vector<1x128xf32> to vector<16x128xf32>
    %5 = arith.addf %2, %4 : vector<16x128xf32>
    %c0_5 = arith.constant 0 : index
    %c0_6 = arith.constant 0 : index
    %c0_7 = arith.constant 0 : index
    %6 = vector.load %arg4[%c0_5, %c0_6, %c0_7] : memref<5x128x128xf32, #tpu.memory_space<vmem>>, vector<1x128x128xf32>
    %7 = vector.shape_cast %6 : vector<1x128x128xf32> to vector<128x128xf32>
    %cst_8 = arith.constant dense<0.000000e+00> : vector<16x128xf32>
    %8 = tpu.matmul %5, %7, %cst_8 {dimension_numbers = #tpu.dot_dimension_numbers<[1], [0], [0], [1], [0, 0, 1, 1], [], []>} : vector<16x128xf32>, vector<128x128xf32>, vector<16x128xf32> -> vector<16x128xf32>
    %c0_9 = arith.constant 0 : index
    %c0_10 = arith.constant 0 : index
    %c0_11 = arith.constant 0 : index
    %9 = vector.load %arg5[%c0_9, %c0_10, %c0_11] : memref<5x1x128xf32, #tpu.memory_space<vmem>>, vector<1x1x128xf32>
    %10 = vector.shape_cast %9 : vector<1x1x128xf32> to vector<1x128xf32>
    %11 = vector.broadcast %10 : vector<1x128xf32> to vector<16x128xf32>
    %12 = arith.addf %8, %11 : vector<16x128xf32>
    %13 = math.tanh %12 : vector<16x128xf32>
    %c1 = arith.constant 1 : index
    %c0_12 = arith.constant 0 : index
    %c0_13 = arith.constant 0 : index
    %14 = vector.load %arg4[%c1, %c0_12, %c0_13] : memref<5x128x128xf32, #tpu.memory_space<vmem>>, vector<1x128x128xf32>
    %15 = vector.shape_cast %14 : vector<1x128x128xf32> to vector<128x128xf32>
    %cst_14 = arith.constant dense<0.000000e+00> : vector<16x128xf32>
    %16 = tpu.matmul %13, %15, %cst_14 {dimension_numbers = #tpu.dot_dimension_numbers<[1], [0], [0], [1], [0, 0, 1, 1], [], []>} : vector<16x128xf32>, vector<128x128xf32>, vector<16x128xf32> -> vector<16x128xf32>
    %c1_15 = arith.constant 1 : index
    %c0_16 = arith.constant 0 : index
    %c0_17 = arith.constant 0 : index
    %17 = vector.load %arg5[%c1_15, %c0_16, %c0_17] : memref<5x1x128xf32, #tpu.memory_space<vmem>>, vector<1x1x128xf32>
    %18 = vector.shape_cast %17 : vector<1x1x128xf32> to vector<1x128xf32>
    %19 = vector.broadcast %18 : vector<1x128xf32> to vector<16x128xf32>
    %20 = arith.addf %16, %19 : vector<16x128xf32>
    %21 = math.tanh %20 : vector<16x128xf32>
    %c2 = arith.constant 2 : index
    %c0_18 = arith.constant 0 : index
    %c0_19 = arith.constant 0 : index
    %22 = vector.load %arg4[%c2, %c0_18, %c0_19] : memref<5x128x128xf32, #tpu.memory_space<vmem>>, vector<1x128x128xf32>
    %23 = vector.shape_cast %22 : vector<1x128x128xf32> to vector<128x128xf32>
    %cst_20 = arith.constant dense<0.000000e+00> : vector<16x128xf32>
    %24 = tpu.matmul %21, %23, %cst_20 {dimension_numbers = #tpu.dot_dimension_numbers<[1], [0], [0], [1], [0, 0, 1, 1], [], []>} : vector<16x128xf32>, vector<128x128xf32>, vector<16x128xf32> -> vector<16x128xf32>
    %c2_21 = arith.constant 2 : index
    %c0_22 = arith.constant 0 : index
    %c0_23 = arith.constant 0 : index
    %25 = vector.load %arg5[%c2_21, %c0_22, %c0_23] : memref<5x1x128xf32, #tpu.memory_space<vmem>>, vector<1x1x128xf32>
    %26 = vector.shape_cast %25 : vector<1x1x128xf32> to vector<1x128xf32>
    %27 = vector.broadcast %26 : vector<1x128xf32> to vector<16x128xf32>
    %28 = arith.addf %24, %27 : vector<16x128xf32>
    %29 = math.tanh %28 : vector<16x128xf32>
    %c3 = arith.constant 3 : index
    %c0_24 = arith.constant 0 : index
    %c0_25 = arith.constant 0 : index
    %30 = vector.load %arg4[%c3, %c0_24, %c0_25] : memref<5x128x128xf32, #tpu.memory_space<vmem>>, vector<1x128x128xf32>
    %31 = vector.shape_cast %30 : vector<1x128x128xf32> to vector<128x128xf32>
    %cst_26 = arith.constant dense<0.000000e+00> : vector<16x128xf32>
    %32 = tpu.matmul %29, %31, %cst_26 {dimension_numbers = #tpu.dot_dimension_numbers<[1], [0], [0], [1], [0, 0, 1, 1], [], []>} : vector<16x128xf32>, vector<128x128xf32>, vector<16x128xf32> -> vector<16x128xf32>
    %c3_27 = arith.constant 3 : index
    %c0_28 = arith.constant 0 : index
    %c0_29 = arith.constant 0 : index
    %33 = vector.load %arg5[%c3_27, %c0_28, %c0_29] : memref<5x1x128xf32, #tpu.memory_space<vmem>>, vector<1x1x128xf32>
    %34 = vector.shape_cast %33 : vector<1x1x128xf32> to vector<1x128xf32>
    %35 = vector.broadcast %34 : vector<1x128xf32> to vector<16x128xf32>
    %36 = arith.addf %32, %35 : vector<16x128xf32>
    %37 = math.tanh %36 : vector<16x128xf32>
    %c4 = arith.constant 4 : index
    %c0_30 = arith.constant 0 : index
    %c0_31 = arith.constant 0 : index
    %38 = vector.load %arg4[%c4, %c0_30, %c0_31] : memref<5x128x128xf32, #tpu.memory_space<vmem>>, vector<1x128x128xf32>
    %39 = vector.shape_cast %38 : vector<1x128x128xf32> to vector<128x128xf32>
    %cst_32 = arith.constant dense<0.000000e+00> : vector<16x128xf32>
    %40 = tpu.matmul %37, %39, %cst_32 {dimension_numbers = #tpu.dot_dimension_numbers<[1], [0], [0], [1], [0, 0, 1, 1], [], []>} : vector<16x128xf32>, vector<128x128xf32>, vector<16x128xf32> -> vector<16x128xf32>
    %c4_33 = arith.constant 4 : index
    %c0_34 = arith.constant 0 : index
    %c0_35 = arith.constant 0 : index
    %41 = vector.load %arg5[%c4_33, %c0_34, %c0_35] : memref<5x1x128xf32, #tpu.memory_space<vmem>>, vector<1x1x128xf32>
    %42 = vector.shape_cast %41 : vector<1x1x128xf32> to vector<1x128xf32>
    %43 = vector.broadcast %42 : vector<1x128xf32> to vector<16x128xf32>
    %44 = arith.addf %40, %43 : vector<16x128xf32>
    %45 = math.tanh %44 : vector<16x128xf32>
    %c0_36 = arith.constant 0 : index
    %c0_37 = arith.constant 0 : index
    %46 = vector.load %arg6[%c0_36, %c0_37] : memref<128x128xf32, #tpu.memory_space<vmem>>, vector<128x128xf32>
    %cst_38 = arith.constant dense<0.000000e+00> : vector<16x128xf32>
    %47 = tpu.matmul %45, %46, %cst_38 {dimension_numbers = #tpu.dot_dimension_numbers<[1], [0], [0], [1], [0, 0, 1, 1], [], []>} : vector<16x128xf32>, vector<128x128xf32>, vector<16x128xf32> -> vector<16x128xf32>
    %c0_39 = arith.constant 0 : index
    %c0_40 = arith.constant 0 : index
    %48 = memref.load %arg7[%c0_39, %c0_40] : memref<1x1xf32, #tpu.memory_space<smem>>
    %49 = vector.broadcast %48 : f32 to vector<16x128xf32>
    %50 = arith.addf %47, %49 : vector<16x128xf32>
    %51 = vector.extract_strided_slice %50 {offsets = [0, 0], sizes = [16, 8], strides = [1, 1]} : vector<16x128xf32> to vector<16x8xf32>
    %c0_41 = arith.constant 0 : index
    %c0_42 = arith.constant 0 : index
    %52 = vector.load %arg8[%c0_41, %c0_42] : memref<16x8xf32, #tpu.memory_space<vmem>>, vector<16x8xf32>
    tpu.vector_store %arg8[%c0_41, %c0_42], %51 {strides = array<i32>} : memref<16x8xf32, #tpu.memory_space<vmem>>, vector<16x8xf32>,
    return
  }
  func.func @transform_0(%arg0: i32) -> (i32, i32) {
    %c0_i32 = arith.constant 0 : i32
    %c0_i32_0 = arith.constant 0 : i32
    return %arg0, %c0_i32 : i32, i32
  }
  func.func @transform_1(%arg0: i32) -> (i32, i32) {
    %c0_i32 = arith.constant 0 : i32
    %c0_i32_0 = arith.constant 0 : i32
    %c0_i32_1 = arith.constant 0 : i32
    return %c0_i32, %c0_i32_0 : i32, i32
  }
  func.func @transform_2(%arg0: i32) -> (i32, i32) {
    %c0_i32 = arith.constant 0 : i32
    %c0_i32_0 = arith.constant 0 : i32
    %c0_i32_1 = arith.constant 0 : i32
    return %c0_i32, %c0_i32_0 : i32, i32
  }
  func.func @transform_3(%arg0: i32) -> (i32, i32, i32) {
    %c0_i32 = arith.constant 0 : i32
    %c0_i32_0 = arith.constant 0 : i32
    %c0_i32_1 = arith.constant 0 : i32
    %c0_i32_2 = arith.constant 0 : i32
    return %c0_i32, %c0_i32_0, %c0_i32_1 : i32, i32, i32
  }
  func.func @transform_4(%arg0: i32) -> (i32, i32, i32) {
    %c0_i32 = arith.constant 0 : i32
    %c0_i32_0 = arith.constant 0 : i32
    %c0_i32_1 = arith.constant 0 : i32
    %c0_i32_2 = arith.constant 0 : i32
    return %c0_i32, %c0_i32_0, %c0_i32_1 : i32, i32, i32
  }
  func.func @transform_5(%arg0: i32) -> (i32, i32) {
    %c0_i32 = arith.constant 0 : i32
    %c0_i32_0 = arith.constant 0 : i32
    %c0_i32_1 = arith.constant 0 : i32
    return %c0_i32, %c0_i32_0 : i32, i32
  }
  func.func @transform_6(%arg0: i32) -> (i32, i32) {
    %c0_i32 = arith.constant 0 : i32
    %c0_i32_0 = arith.constant 0 : i32
    %c0_i32_1 = arith.constant 0 : i32
    return %c0_i32, %c0_i32_0 : i32, i32
  }
  func.func @transform_7(%arg0: i32) -> (i32, i32) {
    %c0_i32 = arith.constant 0 : i32
    %c0_i32_0 = arith.constant 0 : i32
    return %arg0, %c0_i32 : i32, i32
  }
}

</mosaic_0001>

<llo_original>
// kernel: wave_forward.1
$region0: #{wave_forward.1}
  #allocation0 [shape = 'u32[]', space=smem, size = 0x4, offset = 0x4, fixed_abs, tag = 'smem constant byte address 0x4 - core index']
  #allocation1 [shape = 'u32[144,128]{1,0:T(1,128)}', space=vmem, size = 0x12000, scoped, tag = 'internal scratch']
  #allocation2 [shape = 'f32[1,1]{1,0:T(1,128)S(6)}', space=smem, size = 0x200, scoped, tag = 'scoped memory for wave_forward.1']
  %s0 = inlined_call_operand.vmem [shape: f32[32,16], index: 0, kind: input, shape index: {}]
  %s1 = inlined_call_operand.vmem [shape: f32[16,128], index: 1, kind: input, shape index: {}]
  %s2 = inlined_call_operand.vmem [shape: f32[1,128], index: 2, kind: input, shape index: {}]
  %s3 = inlined_call_operand.vmem [shape: f32[5,128,128], index: 3, kind: input, shape index: {}]
  %s4 = inlined_call_operand.vmem [shape: f32[5,1,128], index: 4, kind: input, shape index: {}]
  %s5 = inlined_call_operand.hbm [shape: f32[128,128], index: 5, kind: input, shape index: {}]
  %s6 = inlined_call_operand.<no memory space> [shape: f32[1,1], index: 6, kind: input, shape index: {}]
  %s7 = inlined_call_operand.vmem [shape: f32[32,8], index: 7, kind: output, shape index: {}]
  %s8 = sld [smem:[#allocation0]]
  $region65: #{wave_forward.1} parent=0
    _
  %s10 = ssub.s32 1, %s8
  %s11 = scalar_select 0, %s10, %s8
  %12 = sst [smem:[#allocation2]] %s6
  $region1: #{wave_forward.1} parent=0
    #allocation3 [shape = 'u8[65536]{0}', space=vmem, size = 0x10000, scoped, tag = 'input window, operand 5, single buffered']
    #allocation4 [shape = 's32[2]{0}', space=sflag, size = 0x8, scoped, tag = 'scoped memory for wave_forward.1']
    %13 = vsyncpa [#allocation4], 0
    loop: start=0, step=1, limit=4
    $region2: #{wave_forward.1} parent=1 // loop_pre_header
      _
    $region3: #{wave_forward.1} parent=1 // loop_header
      %s15 = sphi 0, %s19
      %p16 = scmp.ge.s32.totalorder %s15, 4
      %s25 = sphi 0, %s27
      %s28 = sphi 0, %s25
      %s29 = sphi 0, %s28
      %s45 = sphi 0, %s29
      %s49 = sphi 0, %s49
      %s51 = sphi 0, %s49
      %s52 = sphi 0, %s51
      %s66 = sphi 0, %s52
      %s70 = sphi 0, %s70
      %s72 = sphi 0, %s70
      %s73 = sphi 0, %s72
      %s87 = sphi 0, %s73
      %s91 = sphi 0, %s91
      %s93 = sphi 0, %s91
      %s94 = sphi 0, %s93
      %s108 = sphi 0, %s94
      %s112 = sphi 0, %s112
      %s114 = sphi 0, %s112
      %s115 = sphi 0, %s114
      %s129 = sphi 0, %s115
      %s133 = sphi 0, %s133
      %s135 = sphi 0, %s133
      %s136 = sphi 0, %s135
      %s150 = sphi 0, %s136
      %s154 = sphi 0, %s154
      %s156 = sphi 0, %s154
      %s157 = sphi 0, %s156
      %s171 = sphi 0, %s157
      %s177 = sphi 0, %s179
      %s180 = sphi 0, %s177
      %s181 = sphi 0, %s180
      %s197 = sphi 0, %s181
    $region4: #{wave_forward.1} parent=1 // loop_header_branch
      %18 = sbr.rel (%p16) target = $region8
    $region5: #{wave_forward.1} parent=1 // loop_body
      %s20 = ssub.s32 %s15, 1
      %s21 = ssub.s32 %s15, 2
      %s22 = sadd.s32 %s15, 1
      %s23 = ssub.s32 %s15, %s22
      %p24 = scmp.eq.s32.totalorder %s23, 0
      %s26 = sadd.s32 %s25, 1
      %s27 = scalar_select %p24, %s25, %s26
      %p30 = pneg %p24
      %p31 = scmp.eq.s32.totalorder %s15, 1
      %p32 = por %p30, %p31
      %p33 = scmp.ne.s32.totalorder %s25, %s28
      %p34 = scmp.eq.s32.totalorder %s15, 0
      %p35 = por %p33, %p34
      %p36 = scmp.ne.s32.totalorder %s25, %s28
      %p37 = scmp.eq.s32.totalorder %s20, 1
      %p38 = por %p36, %p37
      %p39 = scmp.ne.s32.totalorder %s28, %s29
      %p40 = scmp.eq.s32.totalorder %s20, 0
      %p41 = por %p39, %p40
      %p42 = scmp.ne.s32.totalorder %s28, %s29
      %p43 = scmp.eq.s32.totalorder %s21, 1
      %p44 = por %p42, %p43
      %p46 = scmp.ne.s32.totalorder %s29, %s45
      %p47 = scmp.eq.s32.totalorder %s21, 0
      %p48 = por %p46, %p47
      %s50 = sadd.s32 %s49, 1
      %p53 = scmp.eq.s32.totalorder %s15, 1
      %p54 = scmp.ne.s32.totalorder %s49, %s51
      %p55 = scmp.eq.s32.totalorder %s15, 0
      %p56 = por %p54, %p55
      %p57 = scmp.ne.s32.totalorder %s49, %s51
      %p58 = scmp.eq.s32.totalorder %s20, 1
      %p59 = por %p57, %p58
      %p60 = scmp.ne.s32.totalorder %s51, %s52
      %p61 = scmp.eq.s32.totalorder %s20, 0
      %p62 = por %p60, %p61
      %p63 = scmp.ne.s32.totalorder %s51, %s52
      %p64 = scmp.eq.s32.totalorder %s21, 1
      %p65 = por %p63, %p64
      %p67 = scmp.ne.s32.totalorder %s52, %s66
      %p68 = scmp.eq.s32.totalorder %s21, 0
      %p69 = por %p67, %p68
      %s71 = sadd.s32 %s70, 1
      %p74 = scmp.eq.s32.totalorder %s15, 1
      %p75 = scmp.ne.s32.totalorder %s70, %s72
      %p76 = scmp.eq.s32.totalorder %s15, 0
      %p77 = por %p75, %p76
      %p78 = scmp.ne.s32.totalorder %s70, %s72
      %p79 = scmp.eq.s32.totalorder %s20, 1
      %p80 = por %p78, %p79
      %p81 = scmp.ne.s32.totalorder %s72, %s73
      %p82 = scmp.eq.s32.totalorder %s20, 0
      %p83 = por %p81, %p82
      %p84 = scmp.ne.s32.totalorder %s72, %s73
      %p85 = scmp.eq.s32.totalorder %s21, 1
      %p86 = por %p84, %p85
      %p88 = scmp.ne.s32.totalorder %s73, %s87
      %p89 = scmp.eq.s32.totalorder %s21, 0
      %p90 = por %p88, %p89
      %s92 = sadd.s32 %s91, 1
      %p95 = scmp.eq.s32.totalorder %s15, 1
      %p96 = scmp.ne.s32.totalorder %s91, %s93
      %p97 = scmp.eq.s32.totalorder %s15, 0
      %p98 = por %p96, %p97
      %p99 = scmp.ne.s32.totalorder %s91, %s93
      %p100 = scmp.eq.s32.totalorder %s20, 1
      %p101 = por %p99, %p100
      %p102 = scmp.ne.s32.totalorder %s93, %s94
      %p103 = scmp.eq.s32.totalorder %s20, 0
      %p104 = por %p102, %p103
      %p105 = scmp.ne.s32.totalorder %s93, %s94
      %p106 = scmp.eq.s32.totalorder %s21, 1
      %p107 = por %p105, %p106
      %p109 = scmp.ne.s32.totalorder %s94, %s108
      %p110 = scmp.eq.s32.totalorder %s21, 0
      %p111 = por %p109, %p110
      %s113 = sadd.s32 %s112, 1
      %p116 = scmp.eq.s32.totalorder %s15, 1
      %p117 = scmp.ne.s32.totalorder %s112, %s114
      %p118 = scmp.eq.s32.totalorder %s15, 0
      %p119 = por %p117, %p118
      %p120 = scmp.ne.s32.totalorder %s112, %s114
      %p121 = scmp.eq.s32.totalorder %s20, 1
      %p122 = por %p120, %p121
      %p123 = scmp.ne.s32.totalorder %s114, %s115
      %p124 = scmp.eq.s32.totalorder %s20, 0
      %p125 = por %p123, %p124
      %p126 = scmp.ne.s32.totalorder %s114, %s115
      %p127 = scmp.eq.s32.totalorder %s21, 1
      %p128 = por %p126, %p127
      %p130 = scmp.ne.s32.totalorder %s115, %s129
      %p131 = scmp.eq.s32.totalorder %s21, 0
      %p132 = por %p130, %p131
      %s134 = sadd.s32 %s133, 1
      %p137 = scmp.eq.s32.totalorder %s15, 1
      %p138 = scmp.ne.s32.totalorder %s133, %s135
      %p139 = scmp.eq.s32.totalorder %s15, 0
      %p140 = por %p138, %p139
      %p141 = scmp.ne.s32.totalorder %s133, %s135
      %p142 = scmp.eq.s32.totalorder %s20, 1
      %p143 = por %p141, %p142
      %p144 = scmp.ne.s32.totalorder %s135, %s136
      %p145 = scmp.eq.s32.totalorder %s20, 0
      %p146 = por %p144, %p145
      %p147 = scmp.ne.s32.totalorder %s135, %s136
      %p148 = scmp.eq.s32.totalorder %s21, 1
      %p149 = por %p147, %p148
      %p151 = scmp.ne.s32.totalorder %s136, %s150
      %p152 = scmp.eq.s32.totalorder %s21, 0
      %p153 = por %p151, %p152
      %s155 = sadd.s32 %s154, 1
      %p158 = scmp.eq.s32.totalorder %s15, 1
      %p159 = scmp.ne.s32.totalorder %s154, %s156
      %p160 = scmp.eq.s32.totalorder %s15, 0
      %p161 = por %p159, %p160
      %p162 = scmp.ne.s32.totalorder %s154, %s156
      %p163 = scmp.eq.s32.totalorder %s20, 1
      %p164 = por %p162, %p163
      %p165 = scmp.ne.s32.totalorder %s156, %s157
      %p166 = scmp.eq.s32.totalorder %s20, 0
      %p167 = por %p165, %p166
      %p168 = scmp.ne.s32.totalorder %s156, %s157
      %p169 = scmp.eq.s32.totalorder %s21, 1
      %p170 = por %p168, %p169
      %p172 = scmp.ne.s32.totalorder %s157, %s171
      %p173 = scmp.eq.s32.totalorder %s21, 0
      %p174 = por %p172, %p173
      %s175 = ssub.s32 %s15, %s22
      %p176 = scmp.eq.s32.totalorder %s175, 0
      %s178 = sadd.s32 %s177, 1
      %s179 = scalar_select %p176, %s177, %s178
      %p182 = pneg %p176
      %p183 = scmp.eq.s32.totalorder %s15, 1
      %p184 = por %p182, %p183
      %p185 = scmp.ne.s32.totalorder %s177, %s180
      %p186 = scmp.eq.s32.totalorder %s15, 0
      %p187 = por %p185, %p186
      %p188 = scmp.ne.s32.totalorder %s177, %s180
      %p189 = scmp.eq.s32.totalorder %s20, 1
      %p190 = por %p188, %p189
      %p191 = scmp.ne.s32.totalorder %s180, %s181
      %p192 = scmp.eq.s32.totalorder %s20, 0
      %p193 = por %p191, %p192
      %p194 = scmp.ne.s32.totalorder %s180, %s181
      %p195 = scmp.eq.s32.totalorder %s21, 1
      %p196 = por %p194, %p195
      %p198 = scmp.ne.s32.totalorder %s181, %s197
      %p199 = scmp.eq.s32.totalorder %s21, 0
      %p200 = por %p198, %p199
      %p201 = scmp.le.s32.totalorder 1, %s15
      %p202 = scmp.lt.s32.totalorder %s15, 3
      %p203 = pnand %p201, %p202
      %p204 = pneg %p203
      // Predicated region
      $region9: #{wave_forward.1} parent=5 // pred_check
        _
      $region10: #{wave_forward.1} parent=5 // pred_check_branch
        %206 = sbr.rel (%p203) target = $region12
      $region11: #{wave_forward.1} parent=5 // pred_region
        %s207 = ssub.s32 %s15, 1
        // Predicated region
        $region13: #{wave_forward.1} parent=11 // pred_check
          %p208 = pneg %p62
        $region14: #{wave_forward.1} parent=11 // pred_check_branch
          %210 = sbr.rel (%p208) target = $region16
        $region15: #{wave_forward.1} parent=11 // pred_region
          _
        $region16: #{wave_forward.1} parent=11 // pred_fallthru
          _
        // Predicated region
        $region17: #{wave_forward.1} parent=11 // pred_check
          %p211 = pneg %p83
        $region18: #{wave_forward.1} parent=11 // pred_check_branch
          %213 = sbr.rel (%p211) target = $region20
        $region19: #{wave_forward.1} parent=11 // pred_region
          _
        $region20: #{wave_forward.1} parent=11 // pred_fallthru
          _
        // Predicated region
        $region21: #{wave_forward.1} parent=11 // pred_check
          %p214 = pneg %p104
        $region22: #{wave_forward.1} parent=11 // pred_check_branch
          %216 = sbr.rel (%p214) target = $region24
        $region23: #{wave_forward.1} parent=11 // pred_region
          _
        $region24: #{wave_forward.1} parent=11 // pred_fallthru
          _
        // Predicated region
        $region25: #{wave_forward.1} parent=11 // pred_check
          %p217 = pneg %p125
        $region26: #{wave_forward.1} parent=11 // pred_check_branch
          %219 = sbr.rel (%p217) target = $region28
        $region27: #{wave_forward.1} parent=11 // pred_region
          _
        $region28: #{wave_forward.1} parent=11 // pred_fallthru
          _
        // Predicated region
        $region29: #{wave_forward.1} parent=11 // pred_check
          %p220 = pneg %p146
        $region30: #{wave_forward.1} parent=11 // pred_check_branch
          %222 = sbr.rel (%p220) target = $region32
        $region31: #{wave_forward.1} parent=11 // pred_region
          %s224 = ssub.s32 2048, 2048
          %225 = vsyncadd [#allocation4], %s224
          %s226 = sshll.u32 [#allocation3], 4
          %s227 = int_to_ptr.vmem [resolvable:$true] %s226
          %232 = dma.hbm_to_vmem [thread:$0]  %s5, 2048, %s227, [#allocation4], 128, 128, 8
        $region32: #{wave_forward.1} parent=11 // pred_fallthru
          _
        // Predicated region
        $region33: #{wave_forward.1} parent=11 // pred_check
          %p233 = pneg %p167
        $region34: #{wave_forward.1} parent=11 // pred_check_branch
          %235 = sbr.rel (%p233) target = $region36
        $region35: #{wave_forward.1} parent=11 // pred_region
          _
        $region36: #{wave_forward.1} parent=11 // pred_fallthru
          _
      $region12: #{wave_forward.1} parent=5 // pred_fallthru
        _
      %p236 = scmp.lt.s32.totalorder %s15, 2
      // Predicated region
      $region37: #{wave_forward.1} parent=5 // pred_check
        %p237 = pneg %p236
      $region38: #{wave_forward.1} parent=5 // pred_check_branch
        %239 = sbr.rel (%p237) target = $region40
      $region39: #{wave_forward.1} parent=5 // pred_region
        // Predicated region
        $region41: #{wave_forward.1} parent=39 // pred_check
          %p240 = pneg %p35
        $region42: #{wave_forward.1} parent=39 // pred_check_branch
          %242 = sbr.rel (%p240) target = $region44
        $region43: #{wave_forward.1} parent=39 // pred_region
          %s243 = smul.u32 2, %s15
          %p244 = scmp.lt.s32.totalorder %s243, 3
          %s245 = scalar_select %p244, %s243, 3
          %s246 = smul.addr %s245, 8
          %s247 = scalar_lea.vmem %s0, %s246
          %s248 = smul.u32 2, %s15
        $region44: #{wave_forward.1} parent=39 // pred_fallthru
          _
      $region40: #{wave_forward.1} parent=5 // pred_fallthru
        _
      %p249 = scmp.le.s32.totalorder 1, %s15
      %p250 = scmp.lt.s32.totalorder %s15, 3
      %p251 = pnand %p249, %p250
      %p252 = pneg %p251
      // Predicated region
      $region45: #{wave_forward.1} parent=5 // pred_check
        _
      $region46: #{wave_forward.1} parent=5 // pred_check_branch
        %254 = sbr.rel (%p251) target = $region48
      $region47: #{wave_forward.1} parent=5 // pred_region
        %s255 = ssub.s32 %s15, 1
        // Predicated region
        $region49: #{wave_forward.1} parent=47 // pred_check
          %p256 = pneg %p146
        $region50: #{wave_forward.1} parent=47 // pred_check_branch
          %258 = sbr.rel (%p256) target = $region52
        $region51: #{wave_forward.1} parent=47 // pred_region
          %259 = dma.done [#allocation4], 2048
        $region52: #{wave_forward.1} parent=47 // pred_fallthru
          _
        %s260 = smul.u32 2, %s20
        %p261 = scmp.lt.s32.totalorder %s260, 3
        %s262 = scalar_select %p261, %s260, 3
        %s263 = smul.addr %s262, 8
        %s264 = scalar_lea.vmem %s0, %s263
        %p265 = pneg %p41
        %p266 = pneg %p38
        %p267 = pneg %p62
        %p268 = pneg %p59
        %p269 = pneg %p83
        %p270 = pneg %p80
        %p271 = pneg %p104
        %p272 = pneg %p101
        %p273 = pneg %p125
        %p274 = pneg %p122
        %p275 = pneg %p146
        %p276 = pneg %p143
        %p277 = pneg %p167
        %p278 = pneg %p164
        %p279 = pneg %p193
        %p280 = pneg %p190
        %s281 = smul.u32 2, %s20
        %p282 = scmp.lt.s32.totalorder %s281, 3
        %s283 = scalar_select %p282, %s281, 3
        %s284 = smul.addr %s283, 8
        %s285 = scalar_lea.vmem %s7, %s284
        %s286 = smul.u32 2, %s20
        %p287 = scmp.lt.s32.totalorder %s286, 3
        %s288 = scalar_select %p287, %s286, 3
        %s289 = smul.addr %s288, 8
        %s290 = scalar_lea.vmem %s0, %s289
        %s291 = smul.u32 2, %s20
        %s292 = smul.u32 2, %s20
        %p293 = scmp.lt.s32.totalorder %s292, 3
        %s294 = scalar_select %p293, %s292, 3
        %s295 = smul.addr %s294, 8
        %s296 = scalar_lea.vmem %s7, %s295
        %s297 = smul.u32 2, %s20
        %v298 = vld [vmem:[%s290] sm:$0xff]
        %v299 = vld [vmem:[%s290 + $0x8] sm:$0xff]
        %v300 = vld [vmem:[%s1] sm:$0xff]
        %v301 = vld [vmem:[%s1 + $0x8] sm:$0xff]
        %v302 = vld [vmem:[%s2] sm:$0x1]
        %v304 = vlaneseq
        %v305 = vshrl.u32 %v304, 7
        %v306 = vsub.s32 0, %v305
        %v307 = vrot.slane %v302, %v306
        %vm309 = vcmask 130048
        %v311 = vsel %vm309, %v298, 0
        %v314 = vsel %vm309, %v299, 0
        %316 = vmatprep.subr.mxu0 0.0
        %317 = vmatpush1.msra.mxu0 0.0
        %318 = vmatprep.subr.mxu0 0.0
        %319 = vmatpush1.msra.mxu0 0.0
        %320 = vmatprep.subr.mxu0 0.0
        %321 = vmatpush1.msra.mxu0 0.0
        %322 = vmatprep.subr.mxu0 0.0
        %323 = vmatpush1.msra.mxu0 0.0
        %324 = vmatprep.subr.mxu0 0.0
        %325 = vmatpush1.msra.mxu0 0.0
        %326 = vmatprep.subr.mxu0 0.0
        %327 = vmatpush1.msra.mxu0 0.0
        %328 = vmatprep.subr.mxu0 0.0
        %329 = vmatpush1.msra.mxu0 0.0
        %330 = vmatprep.subr.mxu0 0.0
        %331 = vmatpush1.msra.mxu0 0.0
        %332 = vmatprep.subr.mxu0 0.0
        %333 = vmatpush1.msra.mxu0 0.0
        %334 = vmatprep.subr.mxu0 0.0
        %335 = vmatpush1.msra.mxu0 0.0
        %336 = vmatprep.subr.mxu0 0.0
        %337 = vmatpush1.msra.mxu0 0.0
        %338 = vmatprep.subr.mxu0 0.0
        %339 = vmatpush1.msra.mxu0 0.0
        %340 = vmatprep.subr.mxu0 0.0
        %341 = vmatpush1.msra.mxu0 0.0
        %342 = vmatprep.subr.mxu0 0.0
        %343 = vmatpush1.msra.mxu0 0.0
        %344 = vmatprep.subr.mxu0 0.0
        %345 = vmatpush1.msra.mxu0 %v301
        %346 = vmatprep.subr.mxu0 0.0
        %347 = vmatpush1.msra.mxu0 %v300
        %348 = vmatprep.subr.mxu0 0.0
        %349 = vmatpush2.msra.mxu0 0.0
        %350 = vmatprep.subr.mxu0 0.0
        %351 = vmatpush2.msra.mxu0 0.0
        %352 = vmatprep.subr.mxu0 0.0
        %353 = vmatpush2.msra.mxu0 0.0
        %354 = vmatprep.subr.mxu0 0.0
        %355 = vmatpush2.msra.mxu0 0.0
        %356 = vmatprep.subr.mxu0 0.0
        %357 = vmatpush2.msra.mxu0 0.0
        %358 = vmatprep.subr.mxu0 0.0
        %359 = vmatpush2.msra.mxu0 0.0
        %360 = vmatprep.subr.mxu0 0.0
        %361 = vmatpush2.msra.mxu0 0.0
        %362 = vmatprep.subr.mxu0 0.0
        %363 = vmatpush2.msra.mxu0 0.0
        %364 = vmatprep.subr.mxu0 0.0
        %365 = vmatpush2.msra.mxu0 0.0
        %366 = vmatprep.subr.mxu0 0.0
        %367 = vmatpush2.msra.mxu0 0.0
        %368 = vmatprep.subr.mxu0 0.0
        %369 = vmatpush2.msra.mxu0 0.0
        %370 = vmatprep.subr.mxu0 0.0
        %371 = vmatpush2.msra.mxu0 0.0
        %372 = vmatprep.subr.mxu0 0.0
        %373 = vmatpush2.msra.mxu0 0.0
        %374 = vmatprep.subr.mxu0 0.0
        %375 = vmatpush2.msra.mxu0 0.0
        %376 = vmatprep.subr.mxu0 0.0
        %377 = vmatpush2.msra.mxu0 0.0
        %378 = vmatprep.subr.mxu0 0.0
        %379 = vmatpush2.msra.mxu0 0.0
        %380 = vmatprep.mubr.f32.mxu0 0.0
        %381 = vmatmul.mubr.f32.gmra.mxu0 %v311
        %v382 = vpop.f32.mrf.mxu0
        %v383 = vadd.f32 %v307, %v382
        %v384 = vpop.f32.mrf.mxu0
        %385 = vmatprep.mubr.f32.mxu0 0.0
        %386 = vmatmul.mubr.f32.gmra.mxu0 %v314
        %v387 = vpop.f32.mrf.mxu0
        %v388 = vadd.f32 %v307, %v387
        %v389 = vpop.f32.mrf.mxu0
        %390 = vdwg.mxu0
        %v391 = vld [vmem:[%s3] sm:$0xff]
        %v392 = vld [vmem:[%s3 + $0x8] sm:$0xff]
        %v393 = vld [vmem:[%s3 + $0x10] sm:$0xff]
        %v394 = vld [vmem:[%s3 + $0x18] sm:$0xff]
        %v395 = vld [vmem:[%s3 + $0x20] sm:$0xff]
        %v396 = vld [vmem:[%s3 + $0x28] sm:$0xff]
        %v397 = vld [vmem:[%s3 + $0x30] sm:$0xff]
        %v398 = vld [vmem:[%s3 + $0x38] sm:$0xff]
        %v399 = vld [vmem:[%s3 + $0x40] sm:$0xff]
        %v400 = vld [vmem:[%s3 + $0x48] sm:$0xff]
        %v401 = vld [vmem:[%s3 + $0x50] sm:$0xff]
        %v402 = vld [vmem:[%s3 + $0x58] sm:$0xff]
        %v403 = vld [vmem:[%s3 + $0x60] sm:$0xff]
        %v404 = vld [vmem:[%s3 + $0x68] sm:$0xff]
        %v405 = vld [vmem:[%s3 + $0x70] sm:$0xff]
        %v406 = vld [vmem:[%s3 + $0x78] sm:$0xff]
        %v407 = vld [vmem:[%s4] sm:$0x1]
        %v409 = vlaneseq
        %v410 = vshrl.u32 %v409, 7
        %v411 = vsub.s32 0, %v410
        %v412 = vrot.slane %v407, %v411
        %414 = vmatprep.subr.mxu0 0.0
        %415 = vmatpush1.msra.mxu0 %v406
        %416 = vmatprep.subr.mxu0 0.0
        %417 = vmatpush1.msra.mxu0 %v405
        %418 = vmatprep.subr.mxu0 0.0
        %419 = vmatpush1.msra.mxu0 %v404
        %420 = vmatprep.subr.mxu0 0.0
        %421 = vmatpush1.msra.mxu0 %v403
        %422 = vmatprep.subr.mxu0 0.0
        %423 = vmatpush1.msra.mxu0 %v402
        %424 = vmatprep.subr.mxu0 0.0
        %425 = vmatpush1.msra.mxu0 %v401
        %426 = vmatprep.subr.mxu0 0.0
        %427 = vmatpush1.msra.mxu0 %v400
        %428 = vmatprep.subr.mxu0 0.0
        %429 = vmatpush1.msra.mxu0 %v399
        %430 = vmatprep.subr.mxu0 0.0
        %431 = vmatpush1.msra.mxu0 %v398
        %432 = vmatprep.subr.mxu0 0.0
        %433 = vmatpush1.msra.mxu0 %v397
        %434 = vmatprep.subr.mxu0 0.0
        %435 = vmatpush1.msra.mxu0 %v396
        %436 = vmatprep.subr.mxu0 0.0
        %437 = vmatpush1.msra.mxu0 %v395
        %438 = vmatprep.subr.mxu0 0.0
        %439 = vmatpush1.msra.mxu0 %v394
        %440 = vmatprep.subr.mxu0 0.0
        %441 = vmatpush1.msra.mxu0 %v393
        %442 = vmatprep.subr.mxu0 0.0
        %443 = vmatpush1.msra.mxu0 %v392
        %444 = vmatprep.subr.mxu0 0.0
        %445 = vmatpush1.msra.mxu0 %v391
        %446 = vmatprep.subr.mxu0 0.0
        %447 = vmatpush2.msra.mxu0 0.0
        %448 = vmatprep.subr.mxu0 0.0
        %449 = vmatpush2.msra.mxu0 0.0
        %450 = vmatprep.subr.mxu0 0.0
        %451 = vmatpush2.msra.mxu0 0.0
        %452 = vmatprep.subr.mxu0 0.0
        %453 = vmatpush2.msra.mxu0 0.0
        %454 = vmatprep.subr.mxu0 0.0
        %455 = vmatpush2.msra.mxu0 0.0
        %456 = vmatprep.subr.mxu0 0.0
        %457 = vmatpush2.msra.mxu0 0.0
        %458 = vmatprep.subr.mxu0 0.0
        %459 = vmatpush2.msra.mxu0 0.0
        %460 = vmatprep.subr.mxu0 0.0
        %461 = vmatpush2.msra.mxu0 0.0
        %462 = vmatprep.subr.mxu0 0.0
        %463 = vmatpush2.msra.mxu0 0.0
        %464 = vmatprep.subr.mxu0 0.0
        %465 = vmatpush2.msra.mxu0 0.0
        %466 = vmatprep.subr.mxu0 0.0
        %467 = vmatpush2.msra.mxu0 0.0
        %468 = vmatprep.subr.mxu0 0.0
        %469 = vmatpush2.msra.mxu0 0.0
        %470 = vmatprep.subr.mxu0 0.0
        %471 = vmatpush2.msra.mxu0 0.0
        %472 = vmatprep.subr.mxu0 0.0
        %473 = vmatpush2.msra.mxu0 0.0
        %474 = vmatprep.subr.mxu0 0.0
        %475 = vmatpush2.msra.mxu0 0.0
        %476 = vmatprep.subr.mxu0 0.0
        %477 = vmatpush2.msra.mxu0 0.0
        %478 = vmatprep.mubr.f32.mxu0 0.0
        %479 = vmatmul.mubr.f32.gmra.mxu0 %v383
        %v480 = vpop.f32.mrf.mxu0
        %v481 = vadd.f32 %v412, %v480
        %v482 = vpop.f32.mrf.mxu0
        %483 = vmatprep.mubr.f32.mxu0 0.0
        %484 = vmatmul.mubr.f32.gmra.mxu0 %v388
        %v485 = vpop.f32.mrf.mxu0
        %v486 = vadd.f32 %v412, %v485
        %v487 = vpop.f32.mrf.mxu0
        %488 = vdwg.mxu0
        %v489 = vtanh.pop %v481
        %v490 = vtanh.pop %v486
        %s491 = scalar_lea.vmem %s3, 128
        %v492 = vld [vmem:[%s491] sm:$0xff]
        %v493 = vld [vmem:[%s491 + $0x8] sm:$0xff]
        %v494 = vld [vmem:[%s491 + $0x10] sm:$0xff]
        %v495 = vld [vmem:[%s491 + $0x18] sm:$0xff]
        %v496 = vld [vmem:[%s491 + $0x20] sm:$0xff]
        %v497 = vld [vmem:[%s491 + $0x28] sm:$0xff]
        %v498 = vld [vmem:[%s491 + $0x30] sm:$0xff]
        %v499 = vld [vmem:[%s491 + $0x38] sm:$0xff]
        %v500 = vld [vmem:[%s491 + $0x40] sm:$0xff]
        %v501 = vld [vmem:[%s491 + $0x48] sm:$0xff]
        %v502 = vld [vmem:[%s491 + $0x50] sm:$0xff]
        %v503 = vld [vmem:[%s491 + $0x58] sm:$0xff]
        %v504 = vld [vmem:[%s491 + $0x60] sm:$0xff]
        %v505 = vld [vmem:[%s491 + $0x68] sm:$0xff]
        %v506 = vld [vmem:[%s491 + $0x70] sm:$0xff]
        %v507 = vld [vmem:[%s491 + $0x78] sm:$0xff]
        %s508 = scalar_lea.vmem %s4, 1
        %v509 = vld [vmem:[%s508] sm:$0x1]
        %v511 = vlaneseq
        %v512 = vshrl.u32 %v511, 7
        %v513 = vsub.s32 0, %v512
        %v514 = vrot.slane %v509, %v513
        %516 = vmatprep.subr.mxu0 0.0
        %517 = vmatpush1.msra.mxu0 %v507
        %518 = vmatprep.subr.mxu0 0.0
        %519 = vmatpush1.msra.mxu0 %v506
        %520 = vmatprep.subr.mxu0 0.0
        %521 = vmatpush1.msra.mxu0 %v505
        %522 = vmatprep.subr.mxu0 0.0
        %523 = vmatpush1.msra.mxu0 %v504
        %524 = vmatprep.subr.mxu0 0.0
        %525 = vmatpush1.msra.mxu0 %v503
        %526 = vmatprep.subr.mxu0 0.0
        %527 = vmatpush1.msra.mxu0 %v502
        %528 = vmatprep.subr.mxu0 0.0
        %529 = vmatpush1.msra.mxu0 %v501
        %530 = vmatprep.subr.mxu0 0.0
        %531 = vmatpush1.msra.mxu0 %v500
        %532 = vmatprep.subr.mxu0 0.0
        %533 = vmatpush1.msra.mxu0 %v499
        %534 = vmatprep.subr.mxu0 0.0
        %535 = vmatpush1.msra.mxu0 %v498
        %536 = vmatprep.subr.mxu0 0.0
        %537 = vmatpush1.msra.mxu0 %v497
        %538 = vmatprep.subr.mxu0 0.0
        %539 = vmatpush1.msra.mxu0 %v496
        %540 = vmatprep.subr.mxu0 0.0
        %541 = vmatpush1.msra.mxu0 %v495
        %542 = vmatprep.subr.mxu0 0.0
        %543 = vmatpush1.msra.mxu0 %v494
        %544 = vmatprep.subr.mxu0 0.0
        %545 = vmatpush1.msra.mxu0 %v493
        %546 = vmatprep.subr.mxu0 0.0
        %547 = vmatpush1.msra.mxu0 %v492
        %548 = vmatprep.subr.mxu0 0.0
        %549 = vmatpush2.msra.mxu0 0.0
        %550 = vmatprep.subr.mxu0 0.0
        %551 = vmatpush2.msra.mxu0 0.0
        %552 = vmatprep.subr.mxu0 0.0
        %553 = vmatpush2.msra.mxu0 0.0
        %554 = vmatprep.subr.mxu0 0.0
        %555 = vmatpush2.msra.mxu0 0.0
        %556 = vmatprep.subr.mxu0 0.0
        %557 = vmatpush2.msra.mxu0 0.0
        %558 = vmatprep.subr.mxu0 0.0
        %559 = vmatpush2.msra.mxu0 0.0
        %560 = vmatprep.subr.mxu0 0.0
        %561 = vmatpush2.msra.mxu0 0.0
        %562 = vmatprep.subr.mxu0 0.0
        %563 = vmatpush2.msra.mxu0 0.0
        %564 = vmatprep.subr.mxu0 0.0
        %565 = vmatpush2.msra.mxu0 0.0
        %566 = vmatprep.subr.mxu0 0.0
        %567 = vmatpush2.msra.mxu0 0.0
        %568 = vmatprep.subr.mxu0 0.0
        %569 = vmatpush2.msra.mxu0 0.0
        %570 = vmatprep.subr.mxu0 0.0
        %571 = vmatpush2.msra.mxu0 0.0
        %572 = vmatprep.subr.mxu0 0.0
        %573 = vmatpush2.msra.mxu0 0.0
        %574 = vmatprep.subr.mxu0 0.0
        %575 = vmatpush2.msra.mxu0 0.0
        %576 = vmatprep.subr.mxu0 0.0
        %577 = vmatpush2.msra.mxu0 0.0
        %578 = vmatprep.subr.mxu0 0.0
        %579 = vmatpush2.msra.mxu0 0.0
        %580 = vmatprep.mubr.f32.mxu0 0.0
        %581 = vmatmul.mubr.f32.gmra.mxu0 %v489
        %v582 = vpop.f32.mrf.mxu0
        %v583 = vadd.f32 %v514, %v582
        %v584 = vpop.f32.mrf.mxu0
        %585 = vmatprep.mubr.f32.mxu0 0.0
        %586 = vmatmul.mubr.f32.gmra.mxu0 %v490
        %v587 = vpop.f32.mrf.mxu0
        %v588 = vadd.f32 %v514, %v587
        %v589 = vpop.f32.mrf.mxu0
        %590 = vdwg.mxu0
        %v591 = vtanh.pop %v583
        %v592 = vtanh.pop %v588
        %s593 = scalar_lea.vmem %s3, 256
        %v594 = vld [vmem:[%s593] sm:$0xff]
        %v595 = vld [vmem:[%s593 + $0x8] sm:$0xff]
        %v596 = vld [vmem:[%s593 + $0x10] sm:$0xff]
        %v597 = vld [vmem:[%s593 + $0x18] sm:$0xff]
        %v598 = vld [vmem:[%s593 + $0x20] sm:$0xff]
        %v599 = vld [vmem:[%s593 + $0x28] sm:$0xff]
        %v600 = vld [vmem:[%s593 + $0x30] sm:$0xff]
        %v601 = vld [vmem:[%s593 + $0x38] sm:$0xff]
        %v602 = vld [vmem:[%s593 + $0x40] sm:$0xff]
        %v603 = vld [vmem:[%s593 + $0x48] sm:$0xff]
        %v604 = vld [vmem:[%s593 + $0x50] sm:$0xff]
        %v605 = vld [vmem:[%s593 + $0x58] sm:$0xff]
        %v606 = vld [vmem:[%s593 + $0x60] sm:$0xff]
        %v607 = vld [vmem:[%s593 + $0x68] sm:$0xff]
        %v608 = vld [vmem:[%s593 + $0x70] sm:$0xff]
        %v609 = vld [vmem:[%s593 + $0x78] sm:$0xff]
        %s610 = scalar_lea.vmem %s4, 2
        %v611 = vld [vmem:[%s610] sm:$0x1]
        %v613 = vlaneseq
        %v614 = vshrl.u32 %v613, 7
        %v615 = vsub.s32 0, %v614
        %v616 = vrot.slane %v611, %v615
        %618 = vmatprep.subr.mxu0 0.0
        %619 = vmatpush1.msra.mxu0 %v609
        %620 = vmatprep.subr.mxu0 0.0
        %621 = vmatpush1.msra.mxu0 %v608
        %622 = vmatprep.subr.mxu0 0.0
        %623 = vmatpush1.msra.mxu0 %v607
        %624 = vmatprep.subr.mxu0 0.0
        %625 = vmatpush1.msra.mxu0 %v606
        %626 = vmatprep.subr.mxu0 0.0
        %627 = vmatpush1.msra.mxu0 %v605
        %628 = vmatprep.subr.mxu0 0.0
        %629 = vmatpush1.msra.mxu0 %v604
        %630 = vmatprep.subr.mxu0 0.0
        %631 = vmatpush1.msra.mxu0 %v603
        %632 = vmatprep.subr.mxu0 0.0
        %633 = vmatpush1.msra.mxu0 %v602
        %634 = vmatprep.subr.mxu0 0.0
        %635 = vmatpush1.msra.mxu0 %v601
        %636 = vmatprep.subr.mxu0 0.0
        %637 = vmatpush1.msra.mxu0 %v600
        %638 = vmatprep.subr.mxu0 0.0
        %639 = vmatpush1.msra.mxu0 %v599
        %640 = vmatprep.subr.mxu0 0.0
        %641 = vmatpush1.msra.mxu0 %v598
        %642 = vmatprep.subr.mxu0 0.0
        %643 = vmatpush1.msra.mxu0 %v597
        %644 = vmatprep.subr.mxu0 0.0
        %645 = vmatpush1.msra.mxu0 %v596
        %646 = vmatprep.subr.mxu0 0.0
        %647 = vmatpush1.msra.mxu0 %v595
        %648 = vmatprep.subr.mxu0 0.0
        %649 = vmatpush1.msra.mxu0 %v594
        %650 = vmatprep.subr.mxu0 0.0
        %651 = vmatpush2.msra.mxu0 0.0
        %652 = vmatprep.subr.mxu0 0.0
        %653 = vmatpush2.msra.mxu0 0.0
        %654 = vmatprep.subr.mxu0 0.0
        %655 = vmatpush2.msra.mxu0 0.0
        %656 = vmatprep.subr.mxu0 0.0
        %657 = vmatpush2.msra.mxu0 0.0
        %658 = vmatprep.subr.mxu0 0.0
        %659 = vmatpush2.msra.mxu0 0.0
        %660 = vmatprep.subr.mxu0 0.0
        %661 = vmatpush2.msra.mxu0 0.0
        %662 = vmatprep.subr.mxu0 0.0
        %663 = vmatpush2.msra.mxu0 0.0
        %664 = vmatprep.subr.mxu0 0.0
        %665 = vmatpush2.msra.mxu0 0.0
        %666 = vmatprep.subr.mxu0 0.0
        %667 = vmatpush2.msra.mxu0 0.0
        %668 = vmatprep.subr.mxu0 0.0
        %669 = vmatpush2.msra.mxu0 0.0
        %670 = vmatprep.subr.mxu0 0.0
        %671 = vmatpush2.msra.mxu0 0.0
        %672 = vmatprep.subr.mxu0 0.0
        %673 = vmatpush2.msra.mxu0 0.0
        %674 = vmatprep.subr.mxu0 0.0
        %675 = vmatpush2.msra.mxu0 0.0
        %676 = vmatprep.subr.mxu0 0.0
        %677 = vmatpush2.msra.mxu0 0.0
        %678 = vmatprep.subr.mxu0 0.0
        %679 = vmatpush2.msra.mxu0 0.0
        %680 = vmatprep.subr.mxu0 0.0
        %681 = vmatpush2.msra.mxu0 0.0
        %682 = vmatprep.mubr.f32.mxu0 0.0
        %683 = vmatmul.mubr.f32.gmra.mxu0 %v591
        %v684 = vpop.f32.mrf.mxu0
        %v685 = vadd.f32 %v616, %v684
        %v686 = vpop.f32.mrf.mxu0
        %687 = vmatprep.mubr.f32.mxu0 0.0
        %688 = vmatmul.mubr.f32.gmra.mxu0 %v592
        %v689 = vpop.f32.mrf.mxu0
        %v690 = vadd.f32 %v616, %v689
        %v691 = vpop.f32.mrf.mxu0
        %692 = vdwg.mxu0
        %v693 = vtanh.pop %v685
        %v694 = vtanh.pop %v690
        %s695 = scalar_lea.vmem %s3, 384
        %v696 = vld [vmem:[%s695] sm:$0xff]
        %v697 = vld [vmem:[%s695 + $0x8] sm:$0xff]
        %v698 = vld [vmem:[%s695 + $0x10] sm:$0xff]
        %v699 = vld [vmem:[%s695 + $0x18] sm:$0xff]
        %v700 = vld [vmem:[%s695 + $0x20] sm:$0xff]
        %v701 = vld [vmem:[%s695 + $0x28] sm:$0xff]
        %v702 = vld [vmem:[%s695 + $0x30] sm:$0xff]
        %v703 = vld [vmem:[%s695 + $0x38] sm:$0xff]
        %v704 = vld [vmem:[%s695 + $0x40] sm:$0xff]
        %v705 = vld [vmem:[%s695 + $0x48] sm:$0xff]
        %v706 = vld [vmem:[%s695 + $0x50] sm:$0xff]
        %v707 = vld [vmem:[%s695 + $0x58] sm:$0xff]
        %v708 = vld [vmem:[%s695 + $0x60] sm:$0xff]
        %v709 = vld [vmem:[%s695 + $0x68] sm:$0xff]
        %v710 = vld [vmem:[%s695 + $0x70] sm:$0xff]
        %v711 = vld [vmem:[%s695 + $0x78] sm:$0xff]
        %s712 = scalar_lea.vmem %s4, 3
        %v713 = vld [vmem:[%s712] sm:$0x1]
        %v715 = vlaneseq
        %v716 = vshrl.u32 %v715, 7
        %v717 = vsub.s32 0, %v716
        %v718 = vrot.slane %v713, %v717
        %720 = vmatprep.subr.mxu0 0.0
        %721 = vmatpush1.msra.mxu0 %v711
        %722 = vmatprep.subr.mxu0 0.0
        %723 = vmatpush1.msra.mxu0 %v710
        %724 = vmatprep.subr.mxu0 0.0
        %725 = vmatpush1.msra.mxu0 %v709
        %726 = vmatprep.subr.mxu0 0.0
        %727 = vmatpush1.msra.mxu0 %v708
        %728 = vmatprep.subr.mxu0 0.0
        %729 = vmatpush1.msra.mxu0 %v707
        %730 = vmatprep.subr.mxu0 0.0
        %731 = vmatpush1.msra.mxu0 %v706
        %732 = vmatprep.subr.mxu0 0.0
        %733 = vmatpush1.msra.mxu0 %v705
        %734 = vmatprep.subr.mxu0 0.0
        %735 = vmatpush1.msra.mxu0 %v704
        %736 = vmatprep.subr.mxu0 0.0
        %737 = vmatpush1.msra.mxu0 %v703
        %738 = vmatprep.subr.mxu0 0.0
        %739 = vmatpush1.msra.mxu0 %v702
        %740 = vmatprep.subr.mxu0 0.0
        %741 = vmatpush1.msra.mxu0 %v701
        %742 = vmatprep.subr.mxu0 0.0
        %743 = vmatpush1.msra.mxu0 %v700
        %744 = vmatprep.subr.mxu0 0.0
        %745 = vmatpush1.msra.mxu0 %v699
        %746 = vmatprep.subr.mxu0 0.0
        %747 = vmatpush1.msra.mxu0 %v698
        %748 = vmatprep.subr.mxu0 0.0
        %749 = vmatpush1.msra.mxu0 %v697
        %750 = vmatprep.subr.mxu0 0.0
        %751 = vmatpush1.msra.mxu0 %v696
        %752 = vmatprep.subr.mxu0 0.0
        %753 = vmatpush2.msra.mxu0 0.0
        %754 = vmatprep.subr.mxu0 0.0
        %755 = vmatpush2.msra.mxu0 0.0
        %756 = vmatprep.subr.mxu0 0.0
        %757 = vmatpush2.msra.mxu0 0.0
        %758 = vmatprep.subr.mxu0 0.0
        %759 = vmatpush2.msra.mxu0 0.0
        %760 = vmatprep.subr.mxu0 0.0
        %761 = vmatpush2.msra.mxu0 0.0
        %762 = vmatprep.subr.mxu0 0.0
        %763 = vmatpush2.msra.mxu0 0.0
        %764 = vmatprep.subr.mxu0 0.0
        %765 = vmatpush2.msra.mxu0 0.0
        %766 = vmatprep.subr.mxu0 0.0
        %767 = vmatpush2.msra.mxu0 0.0
        %768 = vmatprep.subr.mxu0 0.0
        %769 = vmatpush2.msra.mxu0 0.0
        %770 = vmatprep.subr.mxu0 0.0
        %771 = vmatpush2.msra.mxu0 0.0
        %772 = vmatprep.subr.mxu0 0.0
        %773 = vmatpush2.msra.mxu0 0.0
        %774 = vmatprep.subr.mxu0 0.0
        %775 = vmatpush2.msra.mxu0 0.0
        %776 = vmatprep.subr.mxu0 0.0
        %777 = vmatpush2.msra.mxu0 0.0
        %778 = vmatprep.subr.mxu0 0.0
        %779 = vmatpush2.msra.mxu0 0.0
        %780 = vmatprep.subr.mxu0 0.0
        %781 = vmatpush2.msra.mxu0 0.0
        %782 = vmatprep.subr.mxu0 0.0
        %783 = vmatpush2.msra.mxu0 0.0
        %784 = vmatprep.mubr.f32.mxu0 0.0
        %785 = vmatmul.mubr.f32.gmra.mxu0 %v693
        %v786 = vpop.f32.mrf.mxu0
        %v787 = vadd.f32 %v718, %v786
        %v788 = vpop.f32.mrf.mxu0
        %789 = vmatprep.mubr.f32.mxu0 0.0
        %790 = vmatmul.mubr.f32.gmra.mxu0 %v694
        %v791 = vpop.f32.mrf.mxu0
        %v792 = vadd.f32 %v718, %v791
        %v793 = vpop.f32.mrf.mxu0
        %794 = vdwg.mxu0
        %v795 = vtanh.pop %v787
        %v796 = vtanh.pop %v792
        %s797 = scalar_lea.vmem %s3, 512
        %v798 = vld [vmem:[%s797] sm:$0xff]
        %v799 = vld [vmem:[%s797 + $0x8] sm:$0xff]
        %v800 = vld [vmem:[%s797 + $0x10] sm:$0xff]
        %v801 = vld [vmem:[%s797 + $0x18] sm:$0xff]
        %v802 = vld [vmem:[%s797 + $0x20] sm:$0xff]
        %v803 = vld [vmem:[%s797 + $0x28] sm:$0xff]
        %v804 = vld [vmem:[%s797 + $0x30] sm:$0xff]
        %v805 = vld [vmem:[%s797 + $0x38] sm:$0xff]
        %v806 = vld [vmem:[%s797 + $0x40] sm:$0xff]
        %v807 = vld [vmem:[%s797 + $0x48] sm:$0xff]
        %v808 = vld [vmem:[%s797 + $0x50] sm:$0xff]
        %v809 = vld [vmem:[%s797 + $0x58] sm:$0xff]
        %v810 = vld [vmem:[%s797 + $0x60] sm:$0xff]
        %v811 = vld [vmem:[%s797 + $0x68] sm:$0xff]
        %v812 = vld [vmem:[%s797 + $0x70] sm:$0xff]
        %v813 = vld [vmem:[%s797 + $0x78] sm:$0xff]
        %s814 = scalar_lea.vmem %s4, 4
        %v815 = vld [vmem:[%s814] sm:$0x1]
        %v817 = vlaneseq
        %v818 = vshrl.u32 %v817, 7
        %v819 = vsub.s32 0, %v818
        %v820 = vrot.slane %v815, %v819
        %822 = vmatprep.subr.mxu0 0.0
        %823 = vmatpush1.msra.mxu0 %v813
        %824 = vmatprep.subr.mxu0 0.0
        %825 = vmatpush1.msra.mxu0 %v812
        %826 = vmatprep.subr.mxu0 0.0
        %827 = vmatpush1.msra.mxu0 %v811
        %828 = vmatprep.subr.mxu0 0.0
        %829 = vmatpush1.msra.mxu0 %v810
        %830 = vmatprep.subr.mxu0 0.0
        %831 = vmatpush1.msra.mxu0 %v809
        %832 = vmatprep.subr.mxu0 0.0
        %833 = vmatpush1.msra.mxu0 %v808
        %834 = vmatprep.subr.mxu0 0.0
        %835 = vmatpush1.msra.mxu0 %v807
        %836 = vmatprep.subr.mxu0 0.0
        %837 = vmatpush1.msra.mxu0 %v806
        %838 = vmatprep.subr.mxu0 0.0
        %839 = vmatpush1.msra.mxu0 %v805
        %840 = vmatprep.subr.mxu0 0.0
        %841 = vmatpush1.msra.mxu0 %v804
        %842 = vmatprep.subr.mxu0 0.0
        %843 = vmatpush1.msra.mxu0 %v803
        %844 = vmatprep.subr.mxu0 0.0
        %845 = vmatpush1.msra.mxu0 %v802
        %846 = vmatprep.subr.mxu0 0.0
        %847 = vmatpush1.msra.mxu0 %v801
        %848 = vmatprep.subr.mxu0 0.0
        %849 = vmatpush1.msra.mxu0 %v800
        %850 = vmatprep.subr.mxu0 0.0
        %851 = vmatpush1.msra.mxu0 %v799
        %852 = vmatprep.subr.mxu0 0.0
        %853 = vmatpush1.msra.mxu0 %v798
        %854 = vmatprep.subr.mxu0 0.0
        %855 = vmatpush2.msra.mxu0 0.0
        %856 = vmatprep.subr.mxu0 0.0
        %857 = vmatpush2.msra.mxu0 0.0
        %858 = vmatprep.subr.mxu0 0.0
        %859 = vmatpush2.msra.mxu0 0.0
        %860 = vmatprep.subr.mxu0 0.0
        %861 = vmatpush2.msra.mxu0 0.0
        %862 = vmatprep.subr.mxu0 0.0
        %863 = vmatpush2.msra.mxu0 0.0
        %864 = vmatprep.subr.mxu0 0.0
        %865 = vmatpush2.msra.mxu0 0.0
        %866 = vmatprep.subr.mxu0 0.0
        %867 = vmatpush2.msra.mxu0 0.0
        %868 = vmatprep.subr.mxu0 0.0
        %869 = vmatpush2.msra.mxu0 0.0
        %870 = vmatprep.subr.mxu0 0.0
        %871 = vmatpush2.msra.mxu0 0.0
        %872 = vmatprep.subr.mxu0 0.0
        %873 = vmatpush2.msra.mxu0 0.0
        %874 = vmatprep.subr.mxu0 0.0
        %875 = vmatpush2.msra.mxu0 0.0
        %876 = vmatprep.subr.mxu0 0.0
        %877 = vmatpush2.msra.mxu0 0.0
        %878 = vmatprep.subr.mxu0 0.0
        %879 = vmatpush2.msra.mxu0 0.0
        %880 = vmatprep.subr.mxu0 0.0
        %881 = vmatpush2.msra.mxu0 0.0
        %882 = vmatprep.subr.mxu0 0.0
        %883 = vmatpush2.msra.mxu0 0.0
        %884 = vmatprep.subr.mxu0 0.0
        %885 = vmatpush2.msra.mxu0 0.0
        %886 = vmatprep.mubr.f32.mxu0 0.0
        %887 = vmatmul.mubr.f32.gmra.mxu0 %v795
        %v888 = vpop.f32.mrf.mxu0
        %v889 = vadd.f32 %v820, %v888
        %v890 = vpop.f32.mrf.mxu0
        %891 = vmatprep.mubr.f32.mxu0 0.0
        %892 = vmatmul.mubr.f32.gmra.mxu0 %v796
        %v893 = vpop.f32.mrf.mxu0
        %v894 = vadd.f32 %v820, %v893
        %v895 = vpop.f32.mrf.mxu0
        %896 = vdwg.mxu0
        %v897 = vtanh.pop %v889
        %v898 = vtanh.pop %v894
        %v899 = vld [vmem:[#allocation3] sm:$0xff]
        %v900 = vld [vmem:[#allocation3 + $0x8] sm:$0xff]
        %v901 = vld [vmem:[#allocation3 + $0x10] sm:$0xff]
        %v902 = vld [vmem:[#allocation3 + $0x18] sm:$0xff]
        %v903 = vld [vmem:[#allocation3 + $0x20] sm:$0xff]
        %v904 = vld [vmem:[#allocation3 + $0x28] sm:$0xff]
        %v905 = vld [vmem:[#allocation3 + $0x30] sm:$0xff]
        %v906 = vld [vmem:[#allocation3 + $0x38] sm:$0xff]
        %v907 = vld [vmem:[#allocation3 + $0x40] sm:$0xff]
        %v908 = vld [vmem:[#allocation3 + $0x48] sm:$0xff]
        %v909 = vld [vmem:[#allocation3 + $0x50] sm:$0xff]
        %v910 = vld [vmem:[#allocation3 + $0x58] sm:$0xff]
        %v911 = vld [vmem:[#allocation3 + $0x60] sm:$0xff]
        %v912 = vld [vmem:[#allocation3 + $0x68] sm:$0xff]
        %v913 = vld [vmem:[#allocation3 + $0x70] sm:$0xff]
        %v914 = vld [vmem:[#allocation3 + $0x78] sm:$0xff]
        %s915 = sld [smem:[#allocation2]]
        %v916 = vstv %s915
        %917 = vmatprep.subr.mxu0 0.0
        %918 = vmatpush1.msra.mxu0 %v914
        %919 = vmatprep.subr.mxu0 0.0
        %920 = vmatpush1.msra.mxu0 %v913
        %921 = vmatprep.subr.mxu0 0.0
        %922 = vmatpush1.msra.mxu0 %v912
        %923 = vmatprep.subr.mxu0 0.0
        %924 = vmatpush1.msra.mxu0 %v911
        %925 = vmatprep.subr.mxu0 0.0
        %926 = vmatpush1.msra.mxu0 %v910
        %927 = vmatprep.subr.mxu0 0.0
        %928 = vmatpush1.msra.mxu0 %v909
        %929 = vmatprep.subr.mxu0 0.0
        %930 = vmatpush1.msra.mxu0 %v908
        %931 = vmatprep.subr.mxu0 0.0
        %932 = vmatpush1.msra.mxu0 %v907
        %933 = vmatprep.subr.mxu0 0.0
        %934 = vmatpush1.msra.mxu0 %v906
        %935 = vmatprep.subr.mxu0 0.0
        %936 = vmatpush1.msra.mxu0 %v905
        %937 = vmatprep.subr.mxu0 0.0
        %938 = vmatpush1.msra.mxu0 %v904
        %939 = vmatprep.subr.mxu0 0.0
        %940 = vmatpush1.msra.mxu0 %v903
        %941 = vmatprep.subr.mxu0 0.0
        %942 = vmatpush1.msra.mxu0 %v902
        %943 = vmatprep.subr.mxu0 0.0
        %944 = vmatpush1.msra.mxu0 %v901
        %945 = vmatprep.subr.mxu0 0.0
        %946 = vmatpush1.msra.mxu0 %v900
        %947 = vmatprep.subr.mxu0 0.0
        %948 = vmatpush1.msra.mxu0 %v899
        %949 = vmatprep.subr.mxu0 0.0
        %950 = vmatpush2.msra.mxu0 0.0
        %951 = vmatprep.subr.mxu0 0.0
        %952 = vmatpush2.msra.mxu0 0.0
        %953 = vmatprep.subr.mxu0 0.0
        %954 = vmatpush2.msra.mxu0 0.0
        %955 = vmatprep.subr.mxu0 0.0
        %956 = vmatpush2.msra.mxu0 0.0
        %957 = vmatprep.subr.mxu0 0.0
        %958 = vmatpush2.msra.mxu0 0.0
        %959 = vmatprep.subr.mxu0 0.0
        %960 = vmatpush2.msra.mxu0 0.0
        %961 = vmatprep.subr.mxu0 0.0
        %962 = vmatpush2.msra.mxu0 0.0
        %963 = vmatprep.subr.mxu0 0.0
        %964 = vmatpush2.msra.mxu0 0.0
        %965 = vmatprep.subr.mxu0 0.0
        %966 = vmatpush2.msra.mxu0 0.0
        %967 = vmatprep.subr.mxu0 0.0
        %968 = vmatpush2.msra.mxu0 0.0
        %969 = vmatprep.subr.mxu0 0.0
        %970 = vmatpush2.msra.mxu0 0.0
        %971 = vmatprep.subr.mxu0 0.0
        %972 = vmatpush2.msra.mxu0 0.0
        %973 = vmatprep.subr.mxu0 0.0
        %974 = vmatpush2.msra.mxu0 0.0
        %975 = vmatprep.subr.mxu0 0.0
        %976 = vmatpush2.msra.mxu0 0.0
        %977 = vmatprep.subr.mxu0 0.0
        %978 = vmatpush2.msra.mxu0 0.0
        %979 = vmatprep.subr.mxu0 0.0
        %980 = vmatpush2.msra.mxu0 0.0
        %981 = vmatprep.mubr.f32.mxu0 0.0
        %982 = vmatmul.mubr.f32.gmra.mxu0 %v897
        %v983 = vpop.f32.mrf.mxu0
        %v984 = vadd.f32 %v916, %v983
        %v985 = vpop.f32.mrf.mxu0
        %986 = vmatprep.mubr.f32.mxu0 0.0
        %987 = vmatmul.mubr.f32.gmra.mxu0 %v898
        %v988 = vpop.f32.mrf.mxu0
        %v989 = vadd.f32 %v916, %v988
        %v990 = vpop.f32.mrf.mxu0
        %991 = vdwg.mxu0
        %vm992 = vcmask 64512
        %993 = vst.msk [vmem:[%s296] sm:$0xff] %vm992, %v984
        %994 = vst.msk [vmem:[%s296 + $0x8] sm:$0xff] %vm992, %v989
        %s995 = smul.u32 2, %s20
        %p996 = scmp.lt.s32.totalorder %s995, 3
        %s997 = scalar_select %p996, %s995, 3
        %s998 = smul.addr %s997, 8
        %s999 = scalar_lea.vmem %s7, %s998
        // Predicated region
        $region53: #{wave_forward.1} parent=47 // pred_check
          %p1000 = pneg %p190
        $region54: #{wave_forward.1} parent=47 // pred_check_branch
          %1002 = sbr.rel (%p1000) target = $region56
        $region55: #{wave_forward.1} parent=47 // pred_region
          %s1003 = smul.u32 2, %s20
        $region56: #{wave_forward.1} parent=47 // pred_fallthru
          _
      $region48: #{wave_forward.1} parent=5 // pred_fallthru
        _
      %p1004 = scmp.le.s32.totalorder 2, %s15
      // Predicated region
      $region57: #{wave_forward.1} parent=5 // pred_check
        %p1005 = pneg %p1004
      $region58: #{wave_forward.1} parent=5 // pred_check_branch
        %1007 = sbr.rel (%p1005) target = $region60
      $region59: #{wave_forward.1} parent=5 // pred_region
        %s1008 = ssub.s32 %s15, 2
        // Predicated region
        $region61: #{wave_forward.1} parent=59 // pred_check
          %p1009 = pneg %p196
        $region62: #{wave_forward.1} parent=59 // pred_check_branch
          %1011 = sbr.rel (%p1009) target = $region64
        $region63: #{wave_forward.1} parent=59 // pred_region
          %s1012 = smul.u32 2, %s21
          %p1013 = scmp.lt.s32.totalorder %s1012, 3
          %s1014 = scalar_select %p1013, %s1012, 3
          %s1015 = smul.addr %s1014, 8
          %s1016 = scalar_lea.vmem %s7, %s1015
        $region64: #{wave_forward.1} parent=59 // pred_fallthru
          _
      $region60: #{wave_forward.1} parent=5 // pred_fallthru
        _
    $region6: #{wave_forward.1} parent=1 // loop_footer
      %s19 = sadd.s32 1, %s15
    $region7: #{wave_forward.1} parent=1 // loop_footer_branch
      %14 = sbr.rel target = $region3
    $region8: #{wave_forward.1} parent=1 // loop_exit
      _
    %1017 = vsyncpa [#allocation4], 1
    %s1018 = scalar_lea.sflag [#allocation4], 1
    %1019 = vsyncpa %s1018, 1

</llo_original>
